<compile_context>
chip_gen: v6e
topology: v6e:2x2x1
jax: 0.10.0
libtpu: 0.0.40
codegen_flags: <defaults>
</compile_context>

<pallas_src>
import functools

import jax
import jax.numpy as jnp
from jax.experimental import pallas as pl
from jax.experimental.pallas import tpu as pltpu


LANES = 128       # lane width / padded feature width of every layer
W_ROWS = 128      # padded weight rows per layer slab (fan_in <= 128 always)
BIAS_ROW = 128    # slab row holding the bias
SLAB_ROWS = 144   # multiple of 16 -> aligned sublane tiles for f32 AND bf16
N_LAYERS = 5


def _round_up(x, m):
    return ((x + m - 1) // m) * m


def _dqn_kernel(x_ref, p_ref, o_ref, *, in_pad):
    """x_ref: (TB, in_pad) f32; p_ref: (5, SLAB_ROWS, 128) packed params;
    o_ref: (TB, out_cols) f32 where out_cols is out_dim (narrow) or 128 (padded)."""
    h = x_ref[...]  # f32

    # Layer 1: contract only over the (padded) real input features.
    w = p_ref[0, 0:in_pad, :]
    b = p_ref[0, BIAS_ROW:BIAS_ROW + 1, :]
    h = jnp.dot(h.astype(w.dtype), w, preferred_element_type=jnp.float32)
    h = jnp.maximum(h + b.astype(jnp.float32), 0.0)

    # Layers 2-4: K=128 padded contractions (padding rows/cols are zero -> exact).
    for i in (1, 2, 3):
        w = p_ref[i, 0:W_ROWS, :]
        b = p_ref[i, BIAS_ROW:BIAS_ROW + 1, :]
        h = jnp.dot(h.astype(w.dtype), w, preferred_element_type=jnp.float32)
        h = jnp.maximum(h + b.astype(jnp.float32), 0.0)

    # Layer 5: linear head, no activation.
    w = p_ref[4, 0:W_ROWS, :]
    b = p_ref[4, BIAS_ROW:BIAS_ROW + 1, :]
    o = jnp.dot(h.astype(w.dtype), w, preferred_element_type=jnp.float32)
    o = o + b.astype(jnp.float32)
    # Narrow (masked) store when o_ref holds only the real logits; identity
    # slice when o_ref is the 128-lane padded buffer.
    o_ref[...] = o[:, :o_ref.shape[-1]].astype(o_ref.dtype)


def pack_dqn_params(params, param_dtype=jnp.float32):
    """One-time packing of PyTorch-layout params [(W(out,in), b(out,)), ...] into a
    single (5, 144, 128) buffer: rows 0..in-1 hold W^T zero-padded to 128x128,
    row 128 holds the bias. Returns (packed, meta).

    param_dtype=jnp.bfloat16 halves param DMA and matches the bf16-native MXU on
    v6e/v7x (accumulation stays f32 in-kernel); keep f32 on v5e for exact parity."""
    assert len(params) == N_LAYERS
    in_dim = int(params[0][0].shape[1])
    out_dim = int(params[-1][0].shape[0])
    # bf16 tiles as (16,128) sublanes -> keep the layer-1 row slice tile-aligned.
    row_align = 8 if jnp.dtype(param_dtype).itemsize == 4 else 16
    in_pad = _round_up(max(in_dim, row_align), row_align)

    slabs = []
    for W, b in params:
        Wt = jnp.asarray(W, jnp.float32).T          # (in_features, out_features)
        bv = jnp.asarray(b, jnp.float32)            # (out_features,)
        fi, fo = Wt.shape
        assert fi <= W_ROWS and fo <= LANES
        slab = jnp.zeros((SLAB_ROWS, LANES), jnp.float32)
        slab = slab.at[:fi, :fo].set(Wt)
        slab = slab.at[BIAS_ROW, :fo].set(bv)
        slabs.append(slab)

    packed = jnp.stack(slabs, axis=0).astype(param_dtype)   # (5, 144, 128)
    meta = {"in_dim": in_dim, "in_pad": in_pad, "out_dim": out_dim}
    return packed, meta


def dqn_forward(x, packed_params, meta, *, tb_max=2048, padded_output=False):
    """x: (B, in_dim) or pre-padded (B, in_pad) f32. packed_params/meta from
    pack_dqn_params. Returns (B, out_dim) logits, or the lane-dense (B, 128)
    buffer (real logits in the first out_dim columns) if padded_output=True."""
    B = x.shape[0]
    in_dim, in_pad, out_dim = meta["in_dim"], meta["in_pad"], meta["out_dim"]

    x = jnp.asarray(x, jnp.float32)
    if x.shape[1] == in_pad:
        pass  # caller pre-padded: preferred, no hidden HBM copy per call
    elif x.shape[1] == in_dim:
        # Fallback only; callers with in_dim % row-align != 0 should pre-pad
        # once outside their training loop instead of paying this copy per call.
        x = jnp.pad(x, ((0, 0), (0, in_pad - in_dim)))
    else:
        raise ValueError(f"x has {x.shape[1]} features, expected {in_dim} or {in_pad}")

    # Batch tiling:
    #  * large tiles (up to tb_max rows) -> few grid steps (0.35us each),
    #    ~85% of HBM roofline vs ~63% at 256-row tiles.
    #  * for B > 64 force nb >= 2 so the "parallel" axis can shard across both
    #    TensorCores on v7x (harmless on single-TC v5e/v6e).
    if B <= 64:
        TB = B
    else:
        TB = min(tb_max, _round_up(pl.cdiv(B, 2), 8))
    nb = pl.cdiv(B, TB)

    out_cols = LANES if padded_output else out_dim

    flops = 2 * B * (in_dim * 64 + 64 * 64 + 64 * 64 + 64 * 32 + 32 * out_dim)
    bytes_accessed = (packed_params.size * packed_params.dtype.itemsize
                      + x.size * x.dtype.itemsize
                      + B * out_cols * 4)

    # Raise the scoped-VMEM limit only when large tiles need it (v5e default 16 MiB).
    param_bytes = packed_params.size * packed_params.dtype.itemsize
    vmem_est = (2 * param_bytes            # param slab (double-buffered by default)
                + 2 * TB * in_pad * 4      # x tiles
                + 2 * TB * out_cols * 4    # out tiles
                + 3 * TB * LANES * 4)      # in-kernel activations headroom
    cp_kwargs = dict(dimension_semantics=("parallel",))
    if vmem_est > 12 * 1024 * 1024:
        cp_kwargs["vmem_limit_bytes"] = min(int(2 * vmem_est), 100 * 1024 * 1024)

    kernel = functools.partial(_dqn_kernel, in_pad=in_pad)

    out = pl.pallas_call(
        kernel,
        out_shape=jax.ShapeDtypeStruct((B, out_cols), jnp.float32),
        grid=(nb,),
        in_specs=[
            pl.BlockSpec((TB, in_pad), lambda i: (i, 0)),
            # Constant index_map -> packed params stay VMEM-resident across the grid.
            pl.BlockSpec(packed_params.shape, lambda i: (0, 0, 0)),
        ],
        out_specs=pl.BlockSpec((TB, out_cols), lambda i: (i, 0)),
        compiler_params=pltpu.CompilerParams(**cp_kwargs),
        cost_estimate=pl.CostEstimate(
            flops=flops, transcendentals=0, bytes_accessed=bytes_accessed),
    )(x, packed_params)

    return out


def init_dqn_params(key, input_dim, output_dim):
    """PyTorch-default init, (out_features, in_features) layout (as nn.Linear stores)."""
    dims = [(input_dim, 64), (64, 64), (64, 64), (64, 32), (32, output_dim)]
    params = []
    for fan_in, fan_out in dims:
        kw, kb, key = jax.random.split(key, 3)
        bound = 1.0 / jnp.sqrt(jnp.float32(fan_in))
        W = jax.random.uniform(kw, (fan_out, fan_in), jnp.float32, -bound, bound)
        b = jax.random.uniform(kb, (fan_out,), jnp.float32, -bound, bound)
        params.append((W, b))
    return params


def dqn_reference(x, params):
    """Pure-JAX reference of the PyTorch forward."""
    h = x
    for i, (W, b) in enumerate(params):
        h = h @ W.T + b
        if i < len(params) - 1:
            h = jnp.maximum(h, 0.0)
    return h


if __name__ == "__main__":
    key = jax.random.PRNGKey(0)
    kx, kp, kx2 = jax.random.split(key, 3)

    input_dim, output_dim = 16, 4
    params = init_dqn_params(kp, input_dim, output_dim)

    # One-time packing (hoisted out of the forward path). f32 = exact parity.
    packed_f32, meta_f32 = pack_dqn_params(params, param_dtype=jnp.float32)

    # Small online-action-selection batch (single grid point, narrow output).
    batch = 8
    x = jax.random.normal(kx, (batch, input_dim), jnp.float32)
    out = jax.block_until_ready(dqn_forward(x, packed_f32, meta_f32))
    ref = dqn_reference(x, params)
    assert out.shape == (batch, output_dim)
    assert jnp.allclose(out, ref, atol=1e-4, rtol=1e-4), "mismatch vs reference (B=8)"

    # Larger replay-style batch: nb >= 2 parallel tiles, narrow (B, out_dim) output.
    batch2 = 512
    x2 = jax.random.normal(kx2, (batch2, input_dim), jnp.float32)
    out2 = jax.block_until_ready(dqn_forward(x2, packed_f32, meta_f32))
    ref2 = dqn_reference(x2, params)
    assert out2.shape == (batch2, output_dim)
    assert jnp.allclose(out2, ref2, atol=1e-4, rtol=1e-4), "mismatch vs reference (B=512)"

    # Padded-output variant (lane-dense (B,128) buffer, for fusing into consumers).
    out2_pad = jax.block_until_ready(
        dqn_forward(x2, packed_f32, meta_f32, padded_output=True))
    assert out2_pad.shape == (batch2, LANES)
    assert jnp.allclose(out2_pad[:, :output_dim], ref2, atol=1e-4, rtol=1e-4), \
        "mismatch vs reference (padded output)"

    # bf16 param packing (production path for v6e/v7x): halved param DMA,
    # f32 accumulation; loosened tolerance since weights/activations are rounded.
    packed_bf16, meta_bf16 = pack_dqn_params(params, param_dtype=jnp.bfloat16)
    out2_bf16 = jax.block_until_ready(dqn_forward(x2, packed_bf16, meta_bf16))
    assert out2_bf16.shape == (batch2, output_dim)
    assert jnp.allclose(out2_bf16, ref2, atol=5e-2, rtol=5e-2), \
        "mismatch vs reference (bf16 params)"

    print("KERNEL_OK")
</pallas_src>

<mosaic_0001>
module attributes {stable_mosaic.version = 11 : i64} {
  func.func @_dqn_kernel(%arg0: i32, %arg1: memref<8x16xf32, #tpu.memory_space<vmem>>, %arg2: memref<5x144x128xf32, #tpu.memory_space<vmem>>, %arg3: memref<8x4xf32, #tpu.memory_space<vmem>>) attributes {dimension_semantics = [#tpu.dimension_semantics<parallel>], iteration_bounds = array<i64: 1>, scalar_prefetch = 0 : i64, scratch_operands = 0 : i64, tpu.core_type = #tpu.core_type<tc>, window_params = [{transform_indices = @transform_0, window_bounds = array<i64: 8, 16>}, {pipeline_mode = #tpu.pipeline_mode<synchronous>, transform_indices = @transform_1, window_bounds = array<i64: 5, 144, 128>}, {transform_indices = @transform_2, window_bounds = array<i64: 8, 4>}]} {
    %c0 = arith.constant 0 : index
    %c0_0 = arith.constant 0 : index
    %0 = vector.load %arg1[%c0, %c0_0] : memref<8x16xf32, #tpu.memory_space<vmem>>, vector<8x16xf32>
    %c0_1 = arith.constant 0 : index
    %c0_2 = arith.constant 0 : index
    %c0_3 = arith.constant 0 : index
    %1 = vector.load %arg2[%c0_1, %c0_2, %c0_3] : memref<5x144x128xf32, #tpu.memory_space<vmem>>, vector<1x16x128xf32>
    %2 = vector.shape_cast %1 : vector<1x16x128xf32> to vector<16x128xf32>
    %c0_4 = arith.constant 0 : index
    %c128 = arith.constant 128 : index
    %c0_5 = arith.constant 0 : index
    %3 = vector.load %arg2[%c0_4, %c128, %c0_5] : memref<5x144x128xf32, #tpu.memory_space<vmem>>, vector<1x1x128xf32>
    %4 = vector.shape_cast %3 : vector<1x1x128xf32> to vector<1x128xf32>
    %cst = arith.constant dense<0.000000e+00> : vector<8x128xf32>
    %5 = tpu.matmul %0, %2, %cst {dimension_numbers = #tpu.dot_dimension_numbers<[1], [0], [0], [1], [0, 0, 1, 1], [], []>} : vector<8x16xf32>, vector<16x128xf32>, vector<8x128xf32> -> vector<8x128xf32>
    %6 = vector.broadcast %4 : vector<1x128xf32> to vector<8x128xf32>
    %7 = arith.addf %5, %6 : vector<8x128xf32>
    %cst_6 = arith.constant 0.000000e+00 : f32
    %8 = vector.broadcast %cst_6 : f32 to vector<8x128xf32>
    %9 = arith.maximumf %7, %8 : vector<8x128xf32>
    %c1 = arith.constant 1 : index
    %c0_7 = arith.constant 0 : index
    %c0_8 = arith.constant 0 : index
    %10 = vector.load %arg2[%c1, %c0_7, %c0_8] : memref<5x144x128xf32, #tpu.memory_space<vmem>>, vector<1x128x128xf32>
    %11 = vector.shape_cast %10 : vector<1x128x128xf32> to vector<128x128xf32>
    %c1_9 = arith.constant 1 : index
    %c128_10 = arith.constant 128 : index
    %c0_11 = arith.constant 0 : index
    %12 = vector.load %arg2[%c1_9, %c128_10, %c0_11] : memref<5x144x128xf32, #tpu.memory_space<vmem>>, vector<1x1x128xf32>
    %13 = vector.shape_cast %12 : vector<1x1x128xf32> to vector<1x128xf32>
    %cst_12 = arith.constant dense<0.000000e+00> : vector<8x128xf32>
    %14 = tpu.matmul %9, %11, %cst_12 {dimension_numbers = #tpu.dot_dimension_numbers<[1], [0], [0], [1], [0, 0, 1, 1], [], []>} : vector<8x128xf32>, vector<128x128xf32>, vector<8x128xf32> -> vector<8x128xf32>
    %15 = vector.broadcast %13 : vector<1x128xf32> to vector<8x128xf32>
    %16 = arith.addf %14, %15 : vector<8x128xf32>
    %cst_13 = arith.constant 0.000000e+00 : f32
    %17 = vector.broadcast %cst_13 : f32 to vector<8x128xf32>
    %18 = arith.maximumf %16, %17 : vector<8x128xf32>
    %c2 = arith.constant 2 : index
    %c0_14 = arith.constant 0 : index
    %c0_15 = arith.constant 0 : index
    %19 = vector.load %arg2[%c2, %c0_14, %c0_15] : memref<5x144x128xf32, #tpu.memory_space<vmem>>, vector<1x128x128xf32>
    %20 = vector.shape_cast %19 : vector<1x128x128xf32> to vector<128x128xf32>
    %c2_16 = arith.constant 2 : index
    %c128_17 = arith.constant 128 : index
    %c0_18 = arith.constant 0 : index
    %21 = vector.load %arg2[%c2_16, %c128_17, %c0_18] : memref<5x144x128xf32, #tpu.memory_space<vmem>>, vector<1x1x128xf32>
    %22 = vector.shape_cast %21 : vector<1x1x128xf32> to vector<1x128xf32>
    %cst_19 = arith.constant dense<0.000000e+00> : vector<8x128xf32>
    %23 = tpu.matmul %18, %20, %cst_19 {dimension_numbers = #tpu.dot_dimension_numbers<[1], [0], [0], [1], [0, 0, 1, 1], [], []>} : vector<8x128xf32>, vector<128x128xf32>, vector<8x128xf32> -> vector<8x128xf32>
    %24 = vector.broadcast %22 : vector<1x128xf32> to vector<8x128xf32>
    %25 = arith.addf %23, %24 : vector<8x128xf32>
    %cst_20 = arith.constant 0.000000e+00 : f32
    %26 = vector.broadcast %cst_20 : f32 to vector<8x128xf32>
    %27 = arith.maximumf %25, %26 : vector<8x128xf32>
    %c3 = arith.constant 3 : index
    %c0_21 = arith.constant 0 : index
    %c0_22 = arith.constant 0 : index
    %28 = vector.load %arg2[%c3, %c0_21, %c0_22] : memref<5x144x128xf32, #tpu.memory_space<vmem>>, vector<1x128x128xf32>
    %29 = vector.shape_cast %28 : vector<1x128x128xf32> to vector<128x128xf32>
    %c3_23 = arith.constant 3 : index
    %c128_24 = arith.constant 128 : index
    %c0_25 = arith.constant 0 : index
    %30 = vector.load %arg2[%c3_23, %c128_24, %c0_25] : memref<5x144x128xf32, #tpu.memory_space<vmem>>, vector<1x1x128xf32>
    %31 = vector.shape_cast %30 : vector<1x1x128xf32> to vector<1x128xf32>
    %cst_26 = arith.constant dense<0.000000e+00> : vector<8x128xf32>
    %32 = tpu.matmul %27, %29, %cst_26 {dimension_numbers = #tpu.dot_dimension_numbers<[1], [0], [0], [1], [0, 0, 1, 1], [], []>} : vector<8x128xf32>, vector<128x128xf32>, vector<8x128xf32> -> vector<8x128xf32>
    %33 = vector.broadcast %31 : vector<1x128xf32> to vector<8x128xf32>
    %34 = arith.addf %32, %33 : vector<8x128xf32>
    %cst_27 = arith.constant 0.000000e+00 : f32
    %35 = vector.broadcast %cst_27 : f32 to vector<8x128xf32>
    %36 = arith.maximumf %34, %35 : vector<8x128xf32>
    %c4 = arith.constant 4 : index
    %c0_28 = arith.constant 0 : index
    %c0_29 = arith.constant 0 : index
    %37 = vector.load %arg2[%c4, %c0_28, %c0_29] : memref<5x144x128xf32, #tpu.memory_space<vmem>>, vector<1x128x128xf32>
    %38 = vector.shape_cast %37 : vector<1x128x128xf32> to vector<128x128xf32>
    %c4_30 = arith.constant 4 : index
    %c128_31 = arith.constant 128 : index
    %c0_32 = arith.constant 0 : index
    %39 = vector.load %arg2[%c4_30, %c128_31, %c0_32] : memref<5x144x128xf32, #tpu.memory_space<vmem>>, vector<1x1x128xf32>
    %40 = vector.shape_cast %39 : vector<1x1x128xf32> to vector<1x128xf32>
    %cst_33 = arith.constant dense<0.000000e+00> : vector<8x128xf32>
    %41 = tpu.matmul %36, %38, %cst_33 {dimension_numbers = #tpu.dot_dimension_numbers<[1], [0], [0], [1], [0, 0, 1, 1], [], []>} : vector<8x128xf32>, vector<128x128xf32>, vector<8x128xf32> -> vector<8x128xf32>
    %42 = vector.broadcast %40 : vector<1x128xf32> to vector<8x128xf32>
    %43 = arith.addf %41, %42 : vector<8x128xf32>
    %44 = vector.extract_strided_slice %43 {offsets = [0, 0], sizes = [8, 4], strides = [1, 1]} : vector<8x128xf32> to vector<8x4xf32>
    %c0_34 = arith.constant 0 : index
    %c0_35 = arith.constant 0 : index
    %45 = vector.load %arg3[%c0_34, %c0_35] : memref<8x4xf32, #tpu.memory_space<vmem>>, vector<8x4xf32>
    tpu.vector_store %arg3[%c0_34, %c0_35], %44 {strides = array<i32>} : memref<8x4xf32, #tpu.memory_space<vmem>>, vector<8x4xf32>,
    return
  }
  func.func @transform_0(%arg0: i32) -> (i32, i32) {
    %c0_i32 = arith.constant 0 : i32
    %c0_i32_0 = arith.constant 0 : i32
    return %arg0, %c0_i32 : i32, i32
  }
  func.func @transform_1(%arg0: i32) -> (i32, i32, i32) {
    %c0_i32 = arith.constant 0 : i32
    %c0_i32_0 = arith.constant 0 : i32
    %c0_i32_1 = arith.constant 0 : i32
    %c0_i32_2 = arith.constant 0 : i32
    return %c0_i32, %c0_i32_0, %c0_i32_1 : i32, i32, i32
  }
  func.func @transform_2(%arg0: i32) -> (i32, i32) {
    %c0_i32 = arith.constant 0 : i32
    %c0_i32_0 = arith.constant 0 : i32
    return %arg0, %c0_i32 : i32, i32
  }
}

</mosaic_0001>

<llo_original>
// kernel: tpu_custom_call.1
$region0: #{tpu_custom_call.1}
  #allocation0 [shape = 'u32[]', space=smem, size = 0x4, offset = 0x4, fixed_abs, tag = 'smem constant byte address 0x4 - core index']
  #allocation1 [shape = 'u32[144,128]{1,0:T(1,128)}', space=vmem, size = 0x12000, scoped, tag = 'internal scratch']
  %s0 = inlined_call_operand.hbm [shape: f32[8,16], index: 0, kind: input, shape index: {}]
  %s1 = inlined_call_operand.hbm [shape: f32[5,144,128], index: 1, kind: input, shape index: {}]
  %s2 = inlined_call_operand.vmem [shape: f32[8,4], index: 2, kind: output, shape index: {}]
  %s3 = sld [smem:[#allocation0]]
  $region26: #{tpu_custom_call.1} parent=0
    _
  %s5 = ssub.s32 1, %s3
  %s6 = scalar_select 0, %s5, %s3
  $region1: #{tpu_custom_call.1} parent=0
    #allocation2 [shape = 'u8[4096]{0}', space=vmem, size = 0x1000, scoped, tag = 'input window, operand 0, single buffered']
    #allocation3 [shape = 's32[1]{0}', space=sflag, size = 0x4, scoped, tag = 'scoped memory for tpu_custom_call.1']
    #allocation4 [shape = 'u8[368640]{0}', space=vmem, size = 0x5a000, scoped, tag = 'input window, operand 1, single buffered']
    #allocation5 [shape = 's32[1]{0}', space=sflag, size = 0x4, scoped, tag = 'scoped memory for tpu_custom_call.1']
    %7 = vsyncpa [#allocation3], 0
    %8 = vsyncpa [#allocation5], 0
    // Predicated region
    $region2: #{tpu_custom_call.1} parent=1 // pred_check
      _
    $region3: #{tpu_custom_call.1} parent=1 // pred_check_branch
      %10 = sbr.rel (0) target = $region5
    $region4: #{tpu_custom_call.1} parent=1 // pred_region
      %s12 = ssub.s32 128, 128
      %13 = vsyncadd [#allocation3], %s12
      %s15 = sshll.u32 [#allocation2], 4
      %s16 = int_to_ptr.vmem [resolvable:$true] %s15
      %18 = dma.hbm_to_vmem [thread:$0]  %s0, 128, %s16, [#allocation3]
    $region5: #{tpu_custom_call.1} parent=1 // pred_fallthru
      _
    // Predicated region
    $region6: #{tpu_custom_call.1} parent=1 // pred_check
      _
    $region7: #{tpu_custom_call.1} parent=1 // pred_check_branch
      %20 = sbr.rel (0) target = $region9
    $region8: #{tpu_custom_call.1} parent=1 // pred_region
      %s22 = ssub.s32 11520, 11520
      %23 = vsyncadd [#allocation5], %s22
      %s24 = sshll.u32 [#allocation4], 4
      %s25 = int_to_ptr.vmem [resolvable:$true] %s24
      %30 = dma.hbm_to_vmem [thread:$0]  %s1, 11520, %s25, [#allocation5], 128, 128, 8
    $region9: #{tpu_custom_call.1} parent=1 // pred_fallthru
      _
    // Predicated region
    $region10: #{tpu_custom_call.1} parent=1 // pred_check
      _
    $region11: #{tpu_custom_call.1} parent=1 // pred_check_branch
      %32 = sbr.rel (0) target = $region13
    $region12: #{tpu_custom_call.1} parent=1 // pred_region
      %33 = dma.done [#allocation3], 128
    $region13: #{tpu_custom_call.1} parent=1 // pred_fallthru
      _
    // Predicated region
    $region14: #{tpu_custom_call.1} parent=1 // pred_check
      _
    $region15: #{tpu_custom_call.1} parent=1 // pred_check_branch
      %35 = sbr.rel (0) target = $region17
    $region16: #{tpu_custom_call.1} parent=1 // pred_region
      %36 = dma.done [#allocation5], 11520
    $region17: #{tpu_custom_call.1} parent=1 // pred_fallthru
      _
    %v37 = vld [vmem:[#allocation2] sm:$0xff]
    %v38 = vld [vmem:[#allocation4] sm:$0xff]
    %v39 = vld [vmem:[#allocation4 + $0x8] sm:$0xff]
    %v40 = vld [vmem:[#allocation4 + $0x80] sm:$0x1]
    %v41 = vlaneseq
    %v42 = vshrl.u32 %v41, 7
    %v43 = vsub.s32 0, %v42
    %v44 = vrot.slane %v40, %v43
    %vm45 = vcmask 130048
    %v47 = vsel %vm45, %v37, 0
    %49 = vmatprep.subr.mxu0 0.0
    %50 = vmatpush1.msra.mxu0 0.0
    %51 = vmatprep.subr.mxu0 0.0
    %52 = vmatpush1.msra.mxu0 0.0
    %53 = vmatprep.subr.mxu0 0.0
    %54 = vmatpush1.msra.mxu0 0.0
    %55 = vmatprep.subr.mxu0 0.0
    %56 = vmatpush1.msra.mxu0 0.0
    %57 = vmatprep.subr.mxu0 0.0
    %58 = vmatpush1.msra.mxu0 0.0
    %59 = vmatprep.subr.mxu0 0.0
    %60 = vmatpush1.msra.mxu0 0.0
    %61 = vmatprep.subr.mxu0 0.0
    %62 = vmatpush1.msra.mxu0 0.0
    %63 = vmatprep.subr.mxu0 0.0
    %64 = vmatpush1.msra.mxu0 0.0
    %65 = vmatprep.subr.mxu0 0.0
    %66 = vmatpush1.msra.mxu0 0.0
    %67 = vmatprep.subr.mxu0 0.0
    %68 = vmatpush1.msra.mxu0 0.0
    %69 = vmatprep.subr.mxu0 0.0
    %70 = vmatpush1.msra.mxu0 0.0
    %71 = vmatprep.subr.mxu0 0.0
    %72 = vmatpush1.msra.mxu0 0.0
    %73 = vmatprep.subr.mxu0 0.0
    %74 = vmatpush1.msra.mxu0 0.0
    %75 = vmatprep.subr.mxu0 0.0
    %76 = vmatpush1.msra.mxu0 0.0
    %77 = vmatprep.subr.mxu0 0.0
    %78 = vmatpush1.msra.mxu0 %v39
    %79 = vmatprep.subr.mxu0 0.0
    %80 = vmatpush1.msra.mxu0 %v38
    %81 = vmatprep.subr.mxu0 0.0
    %82 = vmatpush2.msra.mxu0 0.0
    %83 = vmatprep.subr.mxu0 0.0
    %84 = vmatpush2.msra.mxu0 0.0
    %85 = vmatprep.subr.mxu0 0.0
    %86 = vmatpush2.msra.mxu0 0.0
    %87 = vmatprep.subr.mxu0 0.0
    %88 = vmatpush2.msra.mxu0 0.0
    %89 = vmatprep.subr.mxu0 0.0
    %90 = vmatpush2.msra.mxu0 0.0
    %91 = vmatprep.subr.mxu0 0.0
    %92 = vmatpush2.msra.mxu0 0.0
    %93 = vmatprep.subr.mxu0 0.0
    %94 = vmatpush2.msra.mxu0 0.0
    %95 = vmatprep.subr.mxu0 0.0
    %96 = vmatpush2.msra.mxu0 0.0
    %97 = vmatprep.subr.mxu0 0.0
    %98 = vmatpush2.msra.mxu0 0.0
    %99 = vmatprep.subr.mxu0 0.0
    %100 = vmatpush2.msra.mxu0 0.0
    %101 = vmatprep.subr.mxu0 0.0
    %102 = vmatpush2.msra.mxu0 0.0
    %103 = vmatprep.subr.mxu0 0.0
    %104 = vmatpush2.msra.mxu0 0.0
    %105 = vmatprep.subr.mxu0 0.0
    %106 = vmatpush2.msra.mxu0 0.0
    %107 = vmatprep.subr.mxu0 0.0
    %108 = vmatpush2.msra.mxu0 0.0
    %109 = vmatprep.subr.mxu0 0.0
    %110 = vmatpush2.msra.mxu0 0.0
    %111 = vmatprep.subr.mxu0 0.0
    %112 = vmatpush2.msra.mxu0 0.0
    %113 = vmatprep.mubr.f32.mxu0 0.0
    %114 = vmatmul.mubr.f32.gmra.mxu0 %v47
    %v115 = vpop.f32.mrf.mxu0
    %v116 = vadd.f32 %v44, %v115
    %v117 = vpop.f32.mrf.mxu0
    %118 = vdwg.mxu0
    %v119 = vmax.f32 %v116, 0.0
    %s120 = scalar_lea.vmem [#allocation4], 144
    %v121 = vld [vmem:[%s120] sm:$0xff]
    %v122 = vld [vmem:[%s120 + $0x8] sm:$0xff]
    %v123 = vld [vmem:[%s120 + $0x10] sm:$0xff]
    %v124 = vld [vmem:[%s120 + $0x18] sm:$0xff]
    %v125 = vld [vmem:[%s120 + $0x20] sm:$0xff]
    %v126 = vld [vmem:[%s120 + $0x28] sm:$0xff]
    %v127 = vld [vmem:[%s120 + $0x30] sm:$0xff]
    %v128 = vld [vmem:[%s120 + $0x38] sm:$0xff]
    %v129 = vld [vmem:[%s120 + $0x40] sm:$0xff]
    %v130 = vld [vmem:[%s120 + $0x48] sm:$0xff]
    %v131 = vld [vmem:[%s120 + $0x50] sm:$0xff]
    %v132 = vld [vmem:[%s120 + $0x58] sm:$0xff]
    %v133 = vld [vmem:[%s120 + $0x60] sm:$0xff]
    %v134 = vld [vmem:[%s120 + $0x68] sm:$0xff]
    %v135 = vld [vmem:[%s120 + $0x70] sm:$0xff]
    %v136 = vld [vmem:[%s120 + $0x78] sm:$0xff]
    %v137 = vld [vmem:[%s120 + $0x80] sm:$0x1]
    %v138 = vlaneseq
    %v139 = vshrl.u32 %v138, 7
    %v140 = vsub.s32 0, %v139
    %v141 = vrot.slane %v137, %v140
    %142 = vmatprep.subr.mxu0 0.0
    %143 = vmatpush1.msra.mxu0 %v136
    %144 = vmatprep.subr.mxu0 0.0
    %145 = vmatpush1.msra.mxu0 %v135
    %146 = vmatprep.subr.mxu0 0.0
    %147 = vmatpush1.msra.mxu0 %v134
    %148 = vmatprep.subr.mxu0 0.0
    %149 = vmatpush1.msra.mxu0 %v133
    %150 = vmatprep.subr.mxu0 0.0
    %151 = vmatpush1.msra.mxu0 %v132
    %152 = vmatprep.subr.mxu0 0.0
    %153 = vmatpush1.msra.mxu0 %v131
    %154 = vmatprep.subr.mxu0 0.0
    %155 = vmatpush1.msra.mxu0 %v130
    %156 = vmatprep.subr.mxu0 0.0
    %157 = vmatpush1.msra.mxu0 %v129
    %158 = vmatprep.subr.mxu0 0.0
    %159 = vmatpush1.msra.mxu0 %v128
    %160 = vmatprep.subr.mxu0 0.0
    %161 = vmatpush1.msra.mxu0 %v127
    %162 = vmatprep.subr.mxu0 0.0
    %163 = vmatpush1.msra.mxu0 %v126
    %164 = vmatprep.subr.mxu0 0.0
    %165 = vmatpush1.msra.mxu0 %v125
    %166 = vmatprep.subr.mxu0 0.0
    %167 = vmatpush1.msra.mxu0 %v124
    %168 = vmatprep.subr.mxu0 0.0
    %169 = vmatpush1.msra.mxu0 %v123
    %170 = vmatprep.subr.mxu0 0.0
    %171 = vmatpush1.msra.mxu0 %v122
    %172 = vmatprep.subr.mxu0 0.0
    %173 = vmatpush1.msra.mxu0 %v121
    %174 = vmatprep.subr.mxu0 0.0
    %175 = vmatpush2.msra.mxu0 0.0
    %176 = vmatprep.subr.mxu0 0.0
    %177 = vmatpush2.msra.mxu0 0.0
    %178 = vmatprep.subr.mxu0 0.0
    %179 = vmatpush2.msra.mxu0 0.0
    %180 = vmatprep.subr.mxu0 0.0
    %181 = vmatpush2.msra.mxu0 0.0
    %182 = vmatprep.subr.mxu0 0.0
    %183 = vmatpush2.msra.mxu0 0.0
    %184 = vmatprep.subr.mxu0 0.0
    %185 = vmatpush2.msra.mxu0 0.0
    %186 = vmatprep.subr.mxu0 0.0
    %187 = vmatpush2.msra.mxu0 0.0
    %188 = vmatprep.subr.mxu0 0.0
    %189 = vmatpush2.msra.mxu0 0.0
    %190 = vmatprep.subr.mxu0 0.0
    %191 = vmatpush2.msra.mxu0 0.0
    %192 = vmatprep.subr.mxu0 0.0
    %193 = vmatpush2.msra.mxu0 0.0
    %194 = vmatprep.subr.mxu0 0.0
    %195 = vmatpush2.msra.mxu0 0.0
    %196 = vmatprep.subr.mxu0 0.0
    %197 = vmatpush2.msra.mxu0 0.0
    %198 = vmatprep.subr.mxu0 0.0
    %199 = vmatpush2.msra.mxu0 0.0
    %200 = vmatprep.subr.mxu0 0.0
    %201 = vmatpush2.msra.mxu0 0.0
    %202 = vmatprep.subr.mxu0 0.0
    %203 = vmatpush2.msra.mxu0 0.0
    %204 = vmatprep.subr.mxu0 0.0
    %205 = vmatpush2.msra.mxu0 0.0
    %206 = vmatprep.mubr.f32.mxu0 0.0
    %207 = vmatmul.mubr.f32.gmra.mxu0 %v119
    %v208 = vpop.f32.mrf.mxu0
    %v209 = vadd.f32 %v141, %v208
    %v210 = vpop.f32.mrf.mxu0
    %211 = vdwg.mxu0
    %v212 = vmax.f32 %v209, 0.0
    %s213 = scalar_lea.vmem [#allocation4], 288
    %v214 = vld [vmem:[%s213] sm:$0xff]
    %v215 = vld [vmem:[%s213 + $0x8] sm:$0xff]
    %v216 = vld [vmem:[%s213 + $0x10] sm:$0xff]
    %v217 = vld [vmem:[%s213 + $0x18] sm:$0xff]
    %v218 = vld [vmem:[%s213 + $0x20] sm:$0xff]
    %v219 = vld [vmem:[%s213 + $0x28] sm:$0xff]
    %v220 = vld [vmem:[%s213 + $0x30] sm:$0xff]
    %v221 = vld [vmem:[%s213 + $0x38] sm:$0xff]
    %v222 = vld [vmem:[%s213 + $0x40] sm:$0xff]
    %v223 = vld [vmem:[%s213 + $0x48] sm:$0xff]
    %v224 = vld [vmem:[%s213 + $0x50] sm:$0xff]
    %v225 = vld [vmem:[%s213 + $0x58] sm:$0xff]
    %v226 = vld [vmem:[%s213 + $0x60] sm:$0xff]
    %v227 = vld [vmem:[%s213 + $0x68] sm:$0xff]
    %v228 = vld [vmem:[%s213 + $0x70] sm:$0xff]
    %v229 = vld [vmem:[%s213 + $0x78] sm:$0xff]
    %v230 = vld [vmem:[%s213 + $0x80] sm:$0x1]
    %v231 = vlaneseq
    %v232 = vshrl.u32 %v231, 7
    %v233 = vsub.s32 0, %v232
    %v234 = vrot.slane %v230, %v233
    %235 = vmatprep.subr.mxu0 0.0
    %236 = vmatpush1.msra.mxu0 %v229
    %237 = vmatprep.subr.mxu0 0.0
    %238 = vmatpush1.msra.mxu0 %v228
    %239 = vmatprep.subr.mxu0 0.0
    %240 = vmatpush1.msra.mxu0 %v227
    %241 = vmatprep.subr.mxu0 0.0
    %242 = vmatpush1.msra.mxu0 %v226
    %243 = vmatprep.subr.mxu0 0.0
    %244 = vmatpush1.msra.mxu0 %v225
    %245 = vmatprep.subr.mxu0 0.0
    %246 = vmatpush1.msra.mxu0 %v224
    %247 = vmatprep.subr.mxu0 0.0
    %248 = vmatpush1.msra.mxu0 %v223
    %249 = vmatprep.subr.mxu0 0.0
    %250 = vmatpush1.msra.mxu0 %v222
    %251 = vmatprep.subr.mxu0 0.0
    %252 = vmatpush1.msra.mxu0 %v221
    %253 = vmatprep.subr.mxu0 0.0
    %254 = vmatpush1.msra.mxu0 %v220
    %255 = vmatprep.subr.mxu0 0.0
    %256 = vmatpush1.msra.mxu0 %v219
    %257 = vmatprep.subr.mxu0 0.0
    %258 = vmatpush1.msra.mxu0 %v218
    %259 = vmatprep.subr.mxu0 0.0
    %260 = vmatpush1.msra.mxu0 %v217
    %261 = vmatprep.subr.mxu0 0.0
    %262 = vmatpush1.msra.mxu0 %v216
    %263 = vmatprep.subr.mxu0 0.0
    %264 = vmatpush1.msra.mxu0 %v215
    %265 = vmatprep.subr.mxu0 0.0
    %266 = vmatpush1.msra.mxu0 %v214
    %267 = vmatprep.subr.mxu0 0.0
    %268 = vmatpush2.msra.mxu0 0.0
    %269 = vmatprep.subr.mxu0 0.0
    %270 = vmatpush2.msra.mxu0 0.0
    %271 = vmatprep.subr.mxu0 0.0
    %272 = vmatpush2.msra.mxu0 0.0
    %273 = vmatprep.subr.mxu0 0.0
    %274 = vmatpush2.msra.mxu0 0.0
    %275 = vmatprep.subr.mxu0 0.0
    %276 = vmatpush2.msra.mxu0 0.0
    %277 = vmatprep.subr.mxu0 0.0
    %278 = vmatpush2.msra.mxu0 0.0
    %279 = vmatprep.subr.mxu0 0.0
    %280 = vmatpush2.msra.mxu0 0.0
    %281 = vmatprep.subr.mxu0 0.0
    %282 = vmatpush2.msra.mxu0 0.0
    %283 = vmatprep.subr.mxu0 0.0
    %284 = vmatpush2.msra.mxu0 0.0
    %285 = vmatprep.subr.mxu0 0.0
    %286 = vmatpush2.msra.mxu0 0.0
    %287 = vmatprep.subr.mxu0 0.0
    %288 = vmatpush2.msra.mxu0 0.0
    %289 = vmatprep.subr.mxu0 0.0
    %290 = vmatpush2.msra.mxu0 0.0
    %291 = vmatprep.subr.mxu0 0.0
    %292 = vmatpush2.msra.mxu0 0.0
    %293 = vmatprep.subr.mxu0 0.0
    %294 = vmatpush2.msra.mxu0 0.0
    %295 = vmatprep.subr.mxu0 0.0
    %296 = vmatpush2.msra.mxu0 0.0
    %297 = vmatprep.subr.mxu0 0.0
    %298 = vmatpush2.msra.mxu0 0.0
    %299 = vmatprep.mubr.f32.mxu0 0.0
    %300 = vmatmul.mubr.f32.gmra.mxu0 %v212
    %v301 = vpop.f32.mrf.mxu0
    %v302 = vadd.f32 %v234, %v301
    %v303 = vpop.f32.mrf.mxu0
    %304 = vdwg.mxu0
    %v305 = vmax.f32 %v302, 0.0
    %s306 = scalar_lea.vmem [#allocation4], 432
    %v307 = vld [vmem:[%s306] sm:$0xff]
    %v308 = vld [vmem:[%s306 + $0x8] sm:$0xff]
    %v309 = vld [vmem:[%s306 + $0x10] sm:$0xff]
    %v310 = vld [vmem:[%s306 + $0x18] sm:$0xff]
    %v311 = vld [vmem:[%s306 + $0x20] sm:$0xff]
    %v312 = vld [vmem:[%s306 + $0x28] sm:$0xff]
    %v313 = vld [vmem:[%s306 + $0x30] sm:$0xff]
    %v314 = vld [vmem:[%s306 + $0x38] sm:$0xff]
    %v315 = vld [vmem:[%s306 + $0x40] sm:$0xff]
    %v316 = vld [vmem:[%s306 + $0x48] sm:$0xff]
    %v317 = vld [vmem:[%s306 + $0x50] sm:$0xff]
    %v318 = vld [vmem:[%s306 + $0x58] sm:$0xff]
    %v319 = vld [vmem:[%s306 + $0x60] sm:$0xff]
    %v320 = vld [vmem:[%s306 + $0x68] sm:$0xff]
    %v321 = vld [vmem:[%s306 + $0x70] sm:$0xff]
    %v322 = vld [vmem:[%s306 + $0x78] sm:$0xff]
    %v323 = vld [vmem:[%s306 + $0x80] sm:$0x1]
    %v324 = vlaneseq
    %v325 = vshrl.u32 %v324, 7
    %v326 = vsub.s32 0, %v325
    %v327 = vrot.slane %v323, %v326
    %328 = vmatprep.subr.mxu0 0.0
    %329 = vmatpush1.msra.mxu0 %v322
    %330 = vmatprep.subr.mxu0 0.0
    %331 = vmatpush1.msra.mxu0 %v321
    %332 = vmatprep.subr.mxu0 0.0
    %333 = vmatpush1.msra.mxu0 %v320
    %334 = vmatprep.subr.mxu0 0.0
    %335 = vmatpush1.msra.mxu0 %v319
    %336 = vmatprep.subr.mxu0 0.0
    %337 = vmatpush1.msra.mxu0 %v318
    %338 = vmatprep.subr.mxu0 0.0
    %339 = vmatpush1.msra.mxu0 %v317
    %340 = vmatprep.subr.mxu0 0.0
    %341 = vmatpush1.msra.mxu0 %v316
    %342 = vmatprep.subr.mxu0 0.0
    %343 = vmatpush1.msra.mxu0 %v315
    %344 = vmatprep.subr.mxu0 0.0
    %345 = vmatpush1.msra.mxu0 %v314
    %346 = vmatprep.subr.mxu0 0.0
    %347 = vmatpush1.msra.mxu0 %v313
    %348 = vmatprep.subr.mxu0 0.0
    %349 = vmatpush1.msra.mxu0 %v312
    %350 = vmatprep.subr.mxu0 0.0
    %351 = vmatpush1.msra.mxu0 %v311
    %352 = vmatprep.subr.mxu0 0.0
    %353 = vmatpush1.msra.mxu0 %v310
    %354 = vmatprep.subr.mxu0 0.0
    %355 = vmatpush1.msra.mxu0 %v309
    %356 = vmatprep.subr.mxu0 0.0
    %357 = vmatpush1.msra.mxu0 %v308
    %358 = vmatprep.subr.mxu0 0.0
    %359 = vmatpush1.msra.mxu0 %v307
    %360 = vmatprep.subr.mxu0 0.0
    %361 = vmatpush2.msra.mxu0 0.0
    %362 = vmatprep.subr.mxu0 0.0
    %363 = vmatpush2.msra.mxu0 0.0
    %364 = vmatprep.subr.mxu0 0.0
    %365 = vmatpush2.msra.mxu0 0.0
    %366 = vmatprep.subr.mxu0 0.0
    %367 = vmatpush2.msra.mxu0 0.0
    %368 = vmatprep.subr.mxu0 0.0
    %369 = vmatpush2.msra.mxu0 0.0
    %370 = vmatprep.subr.mxu0 0.0
    %371 = vmatpush2.msra.mxu0 0.0
    %372 = vmatprep.subr.mxu0 0.0
    %373 = vmatpush2.msra.mxu0 0.0
    %374 = vmatprep.subr.mxu0 0.0
    %375 = vmatpush2.msra.mxu0 0.0
    %376 = vmatprep.subr.mxu0 0.0
    %377 = vmatpush2.msra.mxu0 0.0
    %378 = vmatprep.subr.mxu0 0.0
    %379 = vmatpush2.msra.mxu0 0.0
    %380 = vmatprep.subr.mxu0 0.0
    %381 = vmatpush2.msra.mxu0 0.0
    %382 = vmatprep.subr.mxu0 0.0
    %383 = vmatpush2.msra.mxu0 0.0
    %384 = vmatprep.subr.mxu0 0.0
    %385 = vmatpush2.msra.mxu0 0.0
    %386 = vmatprep.subr.mxu0 0.0
    %387 = vmatpush2.msra.mxu0 0.0
    %388 = vmatprep.subr.mxu0 0.0
    %389 = vmatpush2.msra.mxu0 0.0
    %390 = vmatprep.subr.mxu0 0.0
    %391 = vmatpush2.msra.mxu0 0.0
    %392 = vmatprep.mubr.f32.mxu0 0.0
    %393 = vmatmul.mubr.f32.gmra.mxu0 %v305
    %v394 = vpop.f32.mrf.mxu0
    %v395 = vadd.f32 %v327, %v394
    %v396 = vpop.f32.mrf.mxu0
    %397 = vdwg.mxu0
    %v398 = vmax.f32 %v395, 0.0
    %s399 = scalar_lea.vmem [#allocation4], 576
    %v400 = vld [vmem:[%s399] sm:$0xff]
    %v401 = vld [vmem:[%s399 + $0x8] sm:$0xff]
    %v402 = vld [vmem:[%s399 + $0x10] sm:$0xff]
    %v403 = vld [vmem:[%s399 + $0x18] sm:$0xff]
    %v404 = vld [vmem:[%s399 + $0x20] sm:$0xff]
    %v405 = vld [vmem:[%s399 + $0x28] sm:$0xff]
    %v406 = vld [vmem:[%s399 + $0x30] sm:$0xff]
    %v407 = vld [vmem:[%s399 + $0x38] sm:$0xff]
    %v408 = vld [vmem:[%s399 + $0x40] sm:$0xff]
    %v409 = vld [vmem:[%s399 + $0x48] sm:$0xff]
    %v410 = vld [vmem:[%s399 + $0x50] sm:$0xff]
    %v411 = vld [vmem:[%s399 + $0x58] sm:$0xff]
    %v412 = vld [vmem:[%s399 + $0x60] sm:$0xff]
    %v413 = vld [vmem:[%s399 + $0x68] sm:$0xff]
    %v414 = vld [vmem:[%s399 + $0x70] sm:$0xff]
    %v415 = vld [vmem:[%s399 + $0x78] sm:$0xff]
    %v416 = vld [vmem:[%s399 + $0x80] sm:$0x1]
    %v417 = vlaneseq
    %v418 = vshrl.u32 %v417, 7
    %v419 = vsub.s32 0, %v418
    %v420 = vrot.slane %v416, %v419
    %421 = vmatprep.subr.mxu0 0.0
    %422 = vmatpush1.msra.mxu0 %v415
    %423 = vmatprep.subr.mxu0 0.0
    %424 = vmatpush1.msra.mxu0 %v414
    %425 = vmatprep.subr.mxu0 0.0
    %426 = vmatpush1.msra.mxu0 %v413
    %427 = vmatprep.subr.mxu0 0.0
    %428 = vmatpush1.msra.mxu0 %v412
    %429 = vmatprep.subr.mxu0 0.0
    %430 = vmatpush1.msra.mxu0 %v411
    %431 = vmatprep.subr.mxu0 0.0
    %432 = vmatpush1.msra.mxu0 %v410
    %433 = vmatprep.subr.mxu0 0.0
    %434 = vmatpush1.msra.mxu0 %v409
    %435 = vmatprep.subr.mxu0 0.0
    %436 = vmatpush1.msra.mxu0 %v408
    %437 = vmatprep.subr.mxu0 0.0
    %438 = vmatpush1.msra.mxu0 %v407
    %439 = vmatprep.subr.mxu0 0.0
    %440 = vmatpush1.msra.mxu0 %v406
    %441 = vmatprep.subr.mxu0 0.0
    %442 = vmatpush1.msra.mxu0 %v405
    %443 = vmatprep.subr.mxu0 0.0
    %444 = vmatpush1.msra.mxu0 %v404
    %445 = vmatprep.subr.mxu0 0.0
    %446 = vmatpush1.msra.mxu0 %v403
    %447 = vmatprep.subr.mxu0 0.0
    %448 = vmatpush1.msra.mxu0 %v402
    %449 = vmatprep.subr.mxu0 0.0
    %450 = vmatpush1.msra.mxu0 %v401
    %451 = vmatprep.subr.mxu0 0.0
    %452 = vmatpush1.msra.mxu0 %v400
    %453 = vmatprep.subr.mxu0 0.0
    %454 = vmatpush2.msra.mxu0 0.0
    %455 = vmatprep.subr.mxu0 0.0
    %456 = vmatpush2.msra.mxu0 0.0
    %457 = vmatprep.subr.mxu0 0.0
    %458 = vmatpush2.msra.mxu0 0.0
    %459 = vmatprep.subr.mxu0 0.0
    %460 = vmatpush2.msra.mxu0 0.0
    %461 = vmatprep.subr.mxu0 0.0
    %462 = vmatpush2.msra.mxu0 0.0
    %463 = vmatprep.subr.mxu0 0.0
    %464 = vmatpush2.msra.mxu0 0.0
    %465 = vmatprep.subr.mxu0 0.0
    %466 = vmatpush2.msra.mxu0 0.0
    %467 = vmatprep.subr.mxu0 0.0
    %468 = vmatpush2.msra.mxu0 0.0
    %469 = vmatprep.subr.mxu0 0.0
    %470 = vmatpush2.msra.mxu0 0.0
    %471 = vmatprep.subr.mxu0 0.0
    %472 = vmatpush2.msra.mxu0 0.0
    %473 = vmatprep.subr.mxu0 0.0
    %474 = vmatpush2.msra.mxu0 0.0
    %475 = vmatprep.subr.mxu0 0.0
    %476 = vmatpush2.msra.mxu0 0.0
    %477 = vmatprep.subr.mxu0 0.0
    %478 = vmatpush2.msra.mxu0 0.0
    %479 = vmatprep.subr.mxu0 0.0
    %480 = vmatpush2.msra.mxu0 0.0
    %481 = vmatprep.subr.mxu0 0.0
    %482 = vmatpush2.msra.mxu0 0.0
    %483 = vmatprep.subr.mxu0 0.0
    %484 = vmatpush2.msra.mxu0 0.0
    %485 = vmatprep.mubr.f32.mxu0 0.0
    %486 = vmatmul.mubr.f32.gmra.mxu0 %v398
    %v487 = vpop.f32.mrf.mxu0
    %v488 = vadd.f32 %v420, %v487
    %v489 = vpop.f32.mrf.mxu0
    %490 = vdwg.mxu0
    %vm491 = vcmask 31744
    %492 = vst.msk [vmem:[%s2] sm:$0xff] %vm491, %v488
    // Predicated region
    $region18: #{tpu_custom_call.1} parent=1 // pred_check
      _
    $region19: #{tpu_custom_call.1} parent=1 // pred_check_branch
      %494 = sbr.rel (0) target = $region21
    $region20: #{tpu_custom_call.1} parent=1 // pred_region
      _
    $region21: #{tpu_custom_call.1} parent=1 // pred_fallthru
      _
    // Predicated region
    $region22: #{tpu_custom_call.1} parent=1 // pred_check
      _
    $region23: #{tpu_custom_call.1} parent=1 // pred_check_branch
      %496 = sbr.rel (0) target = $region25
    $region24: #{tpu_custom_call.1} parent=1 // pred_region
      _
    $region25: #{tpu_custom_call.1} parent=1 // pred_fallthru
      _
    %497 = vsyncpa [#allocation3], 1
    %498 = vsyncpa [#allocation5], 1

</llo_original>
